<compile_context>
chip_gen: v6e
topology: v6e:2x2x1
jax: 0.10.0
libtpu: 0.0.40
codegen_flags: <defaults>
</compile_context>

<pallas_src>
import jax
import jax.numpy as jnp
from jax.experimental import pallas as pl
from jax.experimental.pallas import tpu as pltpu

# Problem constants (from the PyTorch module)
CIN = 128
COUT = 32
COUT_PAD = 128          # pad Cout to a full 128-lane group -> unmasked, lane-dense stores
KH = KW = 3
PAD = 1


def _round_up(x, m):
    return (x + m - 1) // m * m


def _conv3x3_kernel(x_ref, w_ref, o_ref, pad_ref):
    # x_ref:   (B_BLK, H, W, CIN)        bf16  unpadded NHWC block
    # w_ref:   (KH*KW*CIN, COUT_PAD)     bf16  (kh, kw, cin)-major K, Cout zero-padded to 128
    # o_ref:   (B_BLK*SLAB, COUT_PAD)    f32   flat output slab (row pitch Wp, SLAB rows/image)
    # pad_ref: (B_BLK*SLAB + tail, CIN)  f32   VMEM scratch: zero-padded images, flattened
    b_blk, H, W, _ = x_ref.shape
    Wp = W + 2 * PAD
    M = o_ref.shape[0]
    slab = M // b_blk                      # per-image row pitch (multiple of 8)

    # Fused zero-padding: zero the flat padded buffer, then copy the valid image rows
    # into its interior (static trip counts -> fully unrolled at trace time).
    pad_ref[...] = jnp.zeros(pad_ref.shape, pad_ref.dtype)
    for b in range(b_blk):
        for h in range(H):
            dst = b * slab + (h + PAD) * Wp + PAD
            pad_ref[pl.ds(dst, W), :] = x_ref[b, h, :, :].astype(jnp.float32)

    # im2col: each tap is a static row-offset slice of the flat padded buffer.  Rows
    # that straddle the W/H borders (or the per-image tail) read zeros/junk and are
    # dropped by the wrapper slice.
    patches = jnp.concatenate(
        [pad_ref[pl.ds(kh * Wp + kw, M), :].astype(jnp.bfloat16)
         for kh in range(KH) for kw in range(KW)],
        axis=1)                            # (M, KH*KW*CIN) bf16

    # Single long-K MXU contraction, bf16 in / f32 accumulate, lane-dense 128-wide store.
    o_ref[...] = jnp.dot(patches, w_ref[...], preferred_element_type=jnp.float32)


@jax.jit
def conv2d_3x3(x_nchw, w_oihw):
    """x_nchw: (N, 128, H, W) f32; w_oihw: (32, 128, 3, 3) f32. Returns (N, 32, H, W) f32."""
    N, C, H, W = x_nchw.shape
    assert C == CIN and w_oihw.shape == (COUT, CIN, KH, KW)
    Hp, Wp = H + 2 * PAD, W + 2 * PAD
    slab = _round_up(Hp * Wp, 8)            # per-image output row pitch

    # Block several images per grid step when possible (grow MXU M toward >= 128 rows).
    b_blk = max(1, 128 // max(1, H * W))
    while N % b_blk:
        b_blk -= 1
    grid = (N // b_blk,)
    m_blk = b_blk * slab
    scratch_rows = _round_up(m_blk + (KH - 1) * Wp + (KW - 1), 8)

    # Single fused layout op on the input: NCHW -> NHWC + cast to bf16.
    x_hwc = jnp.transpose(x_nchw, (0, 2, 3, 1)).astype(jnp.bfloat16)

    # OIHW -> (kh, kw, cin, cout) -> (9*Cin, Cout), Cout zero-padded 32 -> 128, bf16.
    w_mat = jnp.transpose(w_oihw, (2, 3, 1, 0)).reshape(KH * KW * CIN, COUT)
    w_pad = jnp.zeros((KH * KW * CIN, COUT_PAD), jnp.bfloat16)
    w_pad = w_pad.at[:, :COUT].set(w_mat.astype(jnp.bfloat16))

    out_flat = pl.pallas_call(
        _conv3x3_kernel,
        out_shape=jax.ShapeDtypeStruct((N * slab, COUT_PAD), jnp.float32),
        grid_spec=pltpu.PrefetchScalarGridSpec(
            num_scalar_prefetch=0,
            grid=grid,
            in_specs=[
                pl.BlockSpec((b_blk, H, W, CIN), lambda i: (i, 0, 0, 0)),
                pl.BlockSpec((KH * KW * CIN, COUT_PAD), lambda i: (0, 0)),
            ],
            out_specs=pl.BlockSpec((m_blk, COUT_PAD), lambda i: (i, 0)),
            scratch_shapes=[pltpu.VMEM((scratch_rows, CIN), jnp.float32)],
        ),
        compiler_params=pltpu.CompilerParams(
            dimension_semantics=("parallel",)),
    )(x_hwc, w_pad)

    # Drop junk rows / padded lanes and restore NCHW in one fused XLA slice+transpose.
    out = out_flat.reshape(N, slab, COUT_PAD)[:, :Hp * Wp, :]
    out = out.reshape(N, Hp, Wp, COUT_PAD)[:, :H, :W, :COUT]
    return jnp.transpose(out, (0, 3, 1, 2))


if __name__ == "__main__":
    key = jax.random.PRNGKey(0)
    kx, kw = jax.random.split(key)

    # Module input shape: torch.Size([1, 128, 7, 7]); Conv2d weight: (32, 128, 3, 3), bias=False.
    x = jax.random.normal(kx, (1, CIN, 7, 7), dtype=jnp.float32)
    w = jax.random.normal(kw, (COUT, CIN, KH, KW), dtype=jnp.float32) * 0.05

    y = conv2d_3x3(x, w)
    jax.block_until_ready(y)
    assert y.shape == (1, COUT, 7, 7)

    # Reference: XLA conv on the same bf16-rounded inputs (the kernel feeds the MXU bf16
    # operands with f32 accumulation).
    xr = x.astype(jnp.bfloat16).astype(jnp.float32)
    wr = w.astype(jnp.bfloat16).astype(jnp.float32)
    y_ref = jax.lax.conv_general_dilated(
        xr, wr, window_strides=(1, 1), padding=((PAD, PAD), (PAD, PAD)),
        dimension_numbers=("NCHW", "OIHW", "NCHW"),
        preferred_element_type=jnp.float32)
    assert jnp.allclose(y, y_ref, atol=1e-2, rtol=1e-2)

    print("KERNEL_OK")
</pallas_src>

<mosaic_0001>
module attributes {stable_mosaic.version = 11 : i64} {
  func.func @_conv3x3_kernel(%arg0: i32, %arg1: memref<1x7x7x128xbf16, #tpu.memory_space<vmem>>, %arg2: memref<1152x128xbf16, #tpu.memory_space<vmem>>, %arg3: memref<88x128xf32, #tpu.memory_space<vmem>>, %arg4: memref<112x128xf32, #tpu.memory_space<vmem>>) attributes {dimension_semantics = [#tpu.dimension_semantics<parallel>], iteration_bounds = array<i64: 1>, scalar_prefetch = 0 : i64, scratch_operands = 1 : i64, tpu.core_type = #tpu.core_type<tc>, window_params = [{transform_indices = @transform_0, window_bounds = array<i64: 1, 7, 7, 128>}, {pipeline_mode = #tpu.pipeline_mode<synchronous>, transform_indices = @transform_1, window_bounds = array<i64: 1152, 128>}, {transform_indices = @transform_2, window_bounds = array<i64: 88, 128>}]} {
    %cst = arith.constant 0.000000e+00 : f32
    %0 = vector.broadcast %cst : f32 to vector<112x128xf32>
    %c0 = arith.constant 0 : index
    %c0_0 = arith.constant 0 : index
    %1 = vector.load %arg4[%c0, %c0_0] : memref<112x128xf32, #tpu.memory_space<vmem>>, vector<112x128xf32>
    tpu.vector_store %arg4[%c0, %c0_0], %0 {strides = array<i32>} : memref<112x128xf32, #tpu.memory_space<vmem>>, vector<112x128xf32>,
    %c0_1 = arith.constant 0 : index
    %c0_2 = arith.constant 0 : index
    %c0_3 = arith.constant 0 : index
    %c0_4 = arith.constant 0 : index
    %2 = vector.load %arg1[%c0_1, %c0_2, %c0_3, %c0_4] : memref<1x7x7x128xbf16, #tpu.memory_space<vmem>>, vector<1x1x7x128xbf16>
    %3 = vector.shape_cast %2 : vector<1x1x7x128xbf16> to vector<7x128xbf16>
    %4 = arith.extf %3 : vector<7x128xbf16> to vector<7x128xf32>
    %c10 = arith.constant 10 : index
    %c0_5 = arith.constant 0 : index
    %5 = vector.load %arg4[%c10, %c0_5] : memref<112x128xf32, #tpu.memory_space<vmem>>, vector<7x128xf32>
    tpu.vector_store %arg4[%c10, %c0_5], %4 {strides = array<i32>} : memref<112x128xf32, #tpu.memory_space<vmem>>, vector<7x128xf32>,
    %c0_6 = arith.constant 0 : index
    %c1 = arith.constant 1 : index
    %c0_7 = arith.constant 0 : index
    %c0_8 = arith.constant 0 : index
    %6 = vector.load %arg1[%c0_6, %c1, %c0_7, %c0_8] : memref<1x7x7x128xbf16, #tpu.memory_space<vmem>>, vector<1x1x7x128xbf16>
    %7 = vector.shape_cast %6 : vector<1x1x7x128xbf16> to vector<7x128xbf16>
    %8 = arith.extf %7 : vector<7x128xbf16> to vector<7x128xf32>
    %c19 = arith.constant 19 : index
    %c0_9 = arith.constant 0 : index
    %9 = vector.load %arg4[%c19, %c0_9] : memref<112x128xf32, #tpu.memory_space<vmem>>, vector<7x128xf32>
    tpu.vector_store %arg4[%c19, %c0_9], %8 {strides = array<i32>} : memref<112x128xf32, #tpu.memory_space<vmem>>, vector<7x128xf32>,
    %c0_10 = arith.constant 0 : index
    %c2 = arith.constant 2 : index
    %c0_11 = arith.constant 0 : index
    %c0_12 = arith.constant 0 : index
    %10 = vector.load %arg1[%c0_10, %c2, %c0_11, %c0_12] : memref<1x7x7x128xbf16, #tpu.memory_space<vmem>>, vector<1x1x7x128xbf16>
    %11 = vector.shape_cast %10 : vector<1x1x7x128xbf16> to vector<7x128xbf16>
    %12 = arith.extf %11 : vector<7x128xbf16> to vector<7x128xf32>
    %c28 = arith.constant 28 : index
    %c0_13 = arith.constant 0 : index
    %13 = vector.load %arg4[%c28, %c0_13] : memref<112x128xf32, #tpu.memory_space<vmem>>, vector<7x128xf32>
    tpu.vector_store %arg4[%c28, %c0_13], %12 {strides = array<i32>} : memref<112x128xf32, #tpu.memory_space<vmem>>, vector<7x128xf32>,
    %c0_14 = arith.constant 0 : index
    %c3 = arith.constant 3 : index
    %c0_15 = arith.constant 0 : index
    %c0_16 = arith.constant 0 : index
    %14 = vector.load %arg1[%c0_14, %c3, %c0_15, %c0_16] : memref<1x7x7x128xbf16, #tpu.memory_space<vmem>>, vector<1x1x7x128xbf16>
    %15 = vector.shape_cast %14 : vector<1x1x7x128xbf16> to vector<7x128xbf16>
    %16 = arith.extf %15 : vector<7x128xbf16> to vector<7x128xf32>
    %c37 = arith.constant 37 : index
    %c0_17 = arith.constant 0 : index
    %17 = vector.load %arg4[%c37, %c0_17] : memref<112x128xf32, #tpu.memory_space<vmem>>, vector<7x128xf32>
    tpu.vector_store %arg4[%c37, %c0_17], %16 {strides = array<i32>} : memref<112x128xf32, #tpu.memory_space<vmem>>, vector<7x128xf32>,
    %c0_18 = arith.constant 0 : index
    %c4 = arith.constant 4 : index
    %c0_19 = arith.constant 0 : index
    %c0_20 = arith.constant 0 : index
    %18 = vector.load %arg1[%c0_18, %c4, %c0_19, %c0_20] : memref<1x7x7x128xbf16, #tpu.memory_space<vmem>>, vector<1x1x7x128xbf16>
    %19 = vector.shape_cast %18 : vector<1x1x7x128xbf16> to vector<7x128xbf16>
    %20 = arith.extf %19 : vector<7x128xbf16> to vector<7x128xf32>
    %c46 = arith.constant 46 : index
    %c0_21 = arith.constant 0 : index
    %21 = vector.load %arg4[%c46, %c0_21] : memref<112x128xf32, #tpu.memory_space<vmem>>, vector<7x128xf32>
    tpu.vector_store %arg4[%c46, %c0_21], %20 {strides = array<i32>} : memref<112x128xf32, #tpu.memory_space<vmem>>, vector<7x128xf32>,
    %c0_22 = arith.constant 0 : index
    %c5 = arith.constant 5 : index
    %c0_23 = arith.constant 0 : index
    %c0_24 = arith.constant 0 : index
    %22 = vector.load %arg1[%c0_22, %c5, %c0_23, %c0_24] : memref<1x7x7x128xbf16, #tpu.memory_space<vmem>>, vector<1x1x7x128xbf16>
    %23 = vector.shape_cast %22 : vector<1x1x7x128xbf16> to vector<7x128xbf16>
    %24 = arith.extf %23 : vector<7x128xbf16> to vector<7x128xf32>
    %c55 = arith.constant 55 : index
    %c0_25 = arith.constant 0 : index
    %25 = vector.load %arg4[%c55, %c0_25] : memref<112x128xf32, #tpu.memory_space<vmem>>, vector<7x128xf32>
    tpu.vector_store %arg4[%c55, %c0_25], %24 {strides = array<i32>} : memref<112x128xf32, #tpu.memory_space<vmem>>, vector<7x128xf32>,
    %c0_26 = arith.constant 0 : index
    %c6 = arith.constant 6 : index
    %c0_27 = arith.constant 0 : index
    %c0_28 = arith.constant 0 : index
    %26 = vector.load %arg1[%c0_26, %c6, %c0_27, %c0_28] : memref<1x7x7x128xbf16, #tpu.memory_space<vmem>>, vector<1x1x7x128xbf16>
    %27 = vector.shape_cast %26 : vector<1x1x7x128xbf16> to vector<7x128xbf16>
    %28 = arith.extf %27 : vector<7x128xbf16> to vector<7x128xf32>
    %c64 = arith.constant 64 : index
    %c0_29 = arith.constant 0 : index
    %29 = vector.load %arg4[%c64, %c0_29] : memref<112x128xf32, #tpu.memory_space<vmem>>, vector<7x128xf32>
    tpu.vector_store %arg4[%c64, %c0_29], %28 {strides = array<i32>} : memref<112x128xf32, #tpu.memory_space<vmem>>, vector<7x128xf32>,
    %c0_30 = arith.constant 0 : index
    %c0_31 = arith.constant 0 : index
    %30 = vector.load %arg4[%c0_30, %c0_31] : memref<112x128xf32, #tpu.memory_space<vmem>>, vector<88x128xf32>
    %31 = arith.truncf %30 : vector<88x128xf32> to vector<88x128xbf16>
    %c1_32 = arith.constant 1 : index
    %c0_33 = arith.constant 0 : index
    %32 = vector.load %arg4[%c1_32, %c0_33] : memref<112x128xf32, #tpu.memory_space<vmem>>, vector<88x128xf32>
    %33 = arith.truncf %32 : vector<88x128xf32> to vector<88x128xbf16>
    %c2_34 = arith.constant 2 : index
    %c0_35 = arith.constant 0 : index
    %34 = vector.load %arg4[%c2_34, %c0_35] : memref<112x128xf32, #tpu.memory_space<vmem>>, vector<88x128xf32>
    %35 = arith.truncf %34 : vector<88x128xf32> to vector<88x128xbf16>
    %c9 = arith.constant 9 : index
    %c0_36 = arith.constant 0 : index
    %36 = vector.load %arg4[%c9, %c0_36] : memref<112x128xf32, #tpu.memory_space<vmem>>, vector<88x128xf32>
    %37 = arith.truncf %36 : vector<88x128xf32> to vector<88x128xbf16>
    %c10_37 = arith.constant 10 : index
    %c0_38 = arith.constant 0 : index
    %38 = vector.load %arg4[%c10_37, %c0_38] : memref<112x128xf32, #tpu.memory_space<vmem>>, vector<88x128xf32>
    %39 = arith.truncf %38 : vector<88x128xf32> to vector<88x128xbf16>
    %c11 = arith.constant 11 : index
    %c0_39 = arith.constant 0 : index
    %40 = vector.load %arg4[%c11, %c0_39] : memref<112x128xf32, #tpu.memory_space<vmem>>, vector<88x128xf32>
    %41 = arith.truncf %40 : vector<88x128xf32> to vector<88x128xbf16>
    %c18 = arith.constant 18 : index
    %c0_40 = arith.constant 0 : index
    %42 = vector.load %arg4[%c18, %c0_40] : memref<112x128xf32, #tpu.memory_space<vmem>>, vector<88x128xf32>
    %43 = arith.truncf %42 : vector<88x128xf32> to vector<88x128xbf16>
    %c19_41 = arith.constant 19 : index
    %c0_42 = arith.constant 0 : index
    %44 = vector.load %arg4[%c19_41, %c0_42] : memref<112x128xf32, #tpu.memory_space<vmem>>, vector<88x128xf32>
    %45 = arith.truncf %44 : vector<88x128xf32> to vector<88x128xbf16>
    %c20 = arith.constant 20 : index
    %c0_43 = arith.constant 0 : index
    %46 = vector.load %arg4[%c20, %c0_43] : memref<112x128xf32, #tpu.memory_space<vmem>>, vector<88x128xf32>
    %47 = arith.truncf %46 : vector<88x128xf32> to vector<88x128xbf16>
    %48 = tpu.concatenate %31, %33, %35, %37, %39, %41, %43, %45, %47 in 1 : vector<88x128xbf16>, vector<88x128xbf16>, vector<88x128xbf16>, vector<88x128xbf16>, vector<88x128xbf16>, vector<88x128xbf16>, vector<88x128xbf16>, vector<88x128xbf16>, vector<88x128xbf16> -> vector<88x1152xbf16>
    %c0_44 = arith.constant 0 : index
    %c0_45 = arith.constant 0 : index
    %49 = vector.load %arg2[%c0_44, %c0_45] : memref<1152x128xbf16, #tpu.memory_space<vmem>>, vector<1152x128xbf16>
    %cst_46 = arith.constant dense<0.000000e+00> : vector<88x128xf32>
    %50 = tpu.matmul %48, %49, %cst_46 {dimension_numbers = #tpu.dot_dimension_numbers<[1], [0], [0], [1], [0, 0, 1, 1], [], []>} : vector<88x1152xbf16>, vector<1152x128xbf16>, vector<88x128xf32> -> vector<88x128xf32>
    %c0_47 = arith.constant 0 : index
    %c0_48 = arith.constant 0 : index
    %51 = vector.load %arg3[%c0_47, %c0_48] : memref<88x128xf32, #tpu.memory_space<vmem>>, vector<88x128xf32>
    tpu.vector_store %arg3[%c0_47, %c0_48], %50 {strides = array<i32>} : memref<88x128xf32, #tpu.memory_space<vmem>>, vector<88x128xf32>,
    return
  }
  func.func @transform_0(%arg0: i32) -> (i32, i32, i32, i32) {
    %c0_i32 = arith.constant 0 : i32
    %c0_i32_0 = arith.constant 0 : i32
    %c0_i32_1 = arith.constant 0 : i32
    %c0_i32_2 = arith.constant 0 : i32
    return %arg0, %c0_i32, %c0_i32_0, %c0_i32_1 : i32, i32, i32, i32
  }
  func.func @transform_1(%arg0: i32) -> (i32, i32) {
    %c0_i32 = arith.constant 0 : i32
    %c0_i32_0 = arith.constant 0 : i32
    %c0_i32_1 = arith.constant 0 : i32
    return %c0_i32, %c0_i32_0 : i32, i32
  }
  func.func @transform_2(%arg0: i32) -> (i32, i32) {
    %c0_i32 = arith.constant 0 : i32
    %c0_i32_0 = arith.constant 0 : i32
    return %arg0, %c0_i32 : i32, i32
  }
}

</mosaic_0001>

<llo_original>
// kernel: conv2d_3x3.1
$region0: #{conv2d_3x3.1}
  #allocation0 [shape = 'u32[]', space=smem, size = 0x4, offset = 0x4, fixed_abs, tag = 'smem constant byte address 0x4 - core index']
  #allocation1 [shape = 'u32[144,128]{1,0:T(1,128)}', space=vmem, size = 0x12000, scoped, tag = 'internal scratch']
  #allocation2 [shape = 'f32[112,128]{1,0:T(8,128)}', space=vmem, size = 0xe000, scoped, tag = 'scratch operand']
  %s0 = inlined_call_operand.vmem [shape: bf16[1,7,7,128], index: 0, kind: input, shape index: {}]
  %s1 = inlined_call_operand.vmem [shape: bf16[1152,128], index: 1, kind: input, shape index: {}]
  %s2 = inlined_call_operand.vmem [shape: f32[88,128], index: 2, kind: output, shape index: {}]
  %s3 = sld [smem:[#allocation0]]
  $region18: #{conv2d_3x3.1} parent=0
    _
  %s5 = ssub.s32 1, %s3
  %s6 = scalar_select 0, %s5, %s3
  // Predicated region
  $region2: #{conv2d_3x3.1} parent=0 // pred_check
    _
  $region3: #{conv2d_3x3.1} parent=0 // pred_check_branch
    %8 = sbr.rel (0) target = $region5
  $region4: #{conv2d_3x3.1} parent=0 // pred_region
    _
  $region5: #{conv2d_3x3.1} parent=0 // pred_fallthru
    _
  // Predicated region
  $region6: #{conv2d_3x3.1} parent=0 // pred_check
    _
  $region7: #{conv2d_3x3.1} parent=0 // pred_check_branch
    %10 = sbr.rel (0) target = $region9
  $region8: #{conv2d_3x3.1} parent=0 // pred_region
    _
  $region9: #{conv2d_3x3.1} parent=0 // pred_fallthru
    _
  %12 = vst [vmem:[#allocation2] sm:$0xff] 0.0
  %13 = vst [vmem:[#allocation2 + $0x8] sm:$0xff] 0.0
  %14 = vst [vmem:[#allocation2 + $0x10] sm:$0xff] 0.0
  %15 = vst [vmem:[#allocation2 + $0x18] sm:$0xff] 0.0
  %16 = vst [vmem:[#allocation2 + $0x20] sm:$0xff] 0.0
  %17 = vst [vmem:[#allocation2 + $0x28] sm:$0xff] 0.0
  %18 = vst [vmem:[#allocation2 + $0x30] sm:$0xff] 0.0
  %19 = vst [vmem:[#allocation2 + $0x38] sm:$0xff] 0.0
  %20 = vst [vmem:[#allocation2 + $0x40] sm:$0xff] 0.0
  %21 = vst [vmem:[#allocation2 + $0x48] sm:$0xff] 0.0
  %22 = vst [vmem:[#allocation2 + $0x50] sm:$0xff] 0.0
  %23 = vst [vmem:[#allocation2 + $0x58] sm:$0xff] 0.0
  %24 = vst [vmem:[#allocation2 + $0x60] sm:$0xff] 0.0
  %25 = vst [vmem:[#allocation2 + $0x68] sm:$0xff] 0.0
  %v26 = vld [vmem:[%s0] sm:$0xf]
  %v27 = vunpack.c.l.bf16 %v26
  %28 = vst [vmem:[#allocation2 + $0xa] sm:$0x7f] %v27
  %s29 = scalar_lea.vmem %s0, 4
  %v30 = vld [vmem:[%s29] sm:$0xf]
  %v31 = vunpack.c.l.bf16 %v30
  %32 = vst [vmem:[#allocation2 + $0x13] sm:$0x7f] %v31
  %s33 = scalar_lea.vmem %s0, 8
  %v34 = vld [vmem:[%s33] sm:$0xf]
  %v35 = vunpack.c.l.bf16 %v34
  %36 = vst [vmem:[#allocation2 + $0x1c] sm:$0x7f] %v35
  %s37 = scalar_lea.vmem %s0, 12
  %v38 = vld [vmem:[%s37] sm:$0xf]
  %v39 = vunpack.c.l.bf16 %v38
  %40 = vst [vmem:[#allocation2 + $0x25] sm:$0x7f] %v39
  %s41 = scalar_lea.vmem %s0, 16
  %v42 = vld [vmem:[%s41] sm:$0xf]
  %v43 = vunpack.c.l.bf16 %v42
  %44 = vst [vmem:[#allocation2 + $0x2e] sm:$0x7f] %v43
  %s45 = scalar_lea.vmem %s0, 20
  %v46 = vld [vmem:[%s45] sm:$0xf]
  %v47 = vunpack.c.l.bf16 %v46
  %48 = vst [vmem:[#allocation2 + $0x37] sm:$0x7f] %v47
  %s49 = scalar_lea.vmem %s0, 24
  %v50 = vld [vmem:[%s49] sm:$0xf]
  %v51 = vunpack.c.l.bf16 %v50
  %52 = vst [vmem:[#allocation2 + $0x40] sm:$0x7f] %v51
  %v53 = vld [vmem:[#allocation2] sm:$0xff]
  %v54 = vld [vmem:[#allocation2 + $0x8] sm:$0xff]
  %v55 = vld [vmem:[#allocation2 + $0x10] sm:$0xff]
  %v56 = vld [vmem:[#allocation2 + $0x18] sm:$0xff]
  %v57 = vld [vmem:[#allocation2 + $0x20] sm:$0xff]
  %v58 = vld [vmem:[#allocation2 + $0x28] sm:$0xff]
  %v59 = vld [vmem:[#allocation2 + $0x30] sm:$0xff]
  %v60 = vld [vmem:[#allocation2 + $0x38] sm:$0xff]
  %v61 = vld [vmem:[#allocation2 + $0x40] sm:$0xff]
  %v62 = vld [vmem:[#allocation2 + $0x48] sm:$0xff]
  %v63 = vld [vmem:[#allocation2 + $0x50] sm:$0xff]
  %v64 = vpack.c.bf16 %v54, %v53
  %v65 = vpack.c.bf16 %v56, %v55
  %v66 = vpack.c.bf16 %v58, %v57
  %v67 = vpack.c.bf16 %v60, %v59
  %v68 = vpack.c.bf16 %v62, %v61
  %v69 = vpack.c.bf16 %v63, %v63
  %v70 = vld [vmem:[#allocation2 + $0x1] sm:$0xff]
  %v71 = vld [vmem:[#allocation2 + $0x9] sm:$0xff]
  %v72 = vld [vmem:[#allocation2 + $0x11] sm:$0xff]
  %v73 = vld [vmem:[#allocation2 + $0x19] sm:$0xff]
  %v74 = vld [vmem:[#allocation2 + $0x21] sm:$0xff]
  %v75 = vld [vmem:[#allocation2 + $0x29] sm:$0xff]
  %v76 = vld [vmem:[#allocation2 + $0x31] sm:$0xff]
  %v77 = vld [vmem:[#allocation2 + $0x39] sm:$0xff]
  %v78 = vld [vmem:[#allocation2 + $0x41] sm:$0xff]
  %v79 = vld [vmem:[#allocation2 + $0x49] sm:$0xff]
  %v80 = vld [vmem:[#allocation2 + $0x51] sm:$0xff]
  %v81 = vpack.c.bf16 %v71, %v70
  %v82 = vpack.c.bf16 %v73, %v72
  %v83 = vpack.c.bf16 %v75, %v74
  %v84 = vpack.c.bf16 %v77, %v76
  %v85 = vpack.c.bf16 %v79, %v78
  %v86 = vpack.c.bf16 %v80, %v80
  %v87 = vld [vmem:[#allocation2 + $0x2] sm:$0xff]
  %v88 = vld [vmem:[#allocation2 + $0xa] sm:$0xff]
  %v89 = vld [vmem:[#allocation2 + $0x12] sm:$0xff]
  %v90 = vld [vmem:[#allocation2 + $0x1a] sm:$0xff]
  %v91 = vld [vmem:[#allocation2 + $0x22] sm:$0xff]
  %v92 = vld [vmem:[#allocation2 + $0x2a] sm:$0xff]
  %v93 = vld [vmem:[#allocation2 + $0x32] sm:$0xff]
  %v94 = vld [vmem:[#allocation2 + $0x3a] sm:$0xff]
  %v95 = vld [vmem:[#allocation2 + $0x42] sm:$0xff]
  %v96 = vld [vmem:[#allocation2 + $0x4a] sm:$0xff]
  %v97 = vld [vmem:[#allocation2 + $0x52] sm:$0xff]
  %v98 = vpack.c.bf16 %v88, %v87
  %v99 = vpack.c.bf16 %v90, %v89
  %v100 = vpack.c.bf16 %v92, %v91
  %v101 = vpack.c.bf16 %v94, %v93
  %v102 = vpack.c.bf16 %v96, %v95
  %v103 = vpack.c.bf16 %v97, %v97
  %v104 = vld [vmem:[#allocation2 + $0x59] sm:$0xff]
  %v105 = vpack.c.bf16 %v72, %v71
  %v106 = vpack.c.bf16 %v74, %v73
  %v107 = vpack.c.bf16 %v76, %v75
  %v108 = vpack.c.bf16 %v78, %v77
  %v109 = vpack.c.bf16 %v80, %v79
  %v110 = vpack.c.bf16 %v104, %v104
  %v111 = vld [vmem:[#allocation2 + $0x5a] sm:$0xff]
  %v112 = vpack.c.bf16 %v89, %v88
  %v113 = vpack.c.bf16 %v91, %v90
  %v114 = vpack.c.bf16 %v93, %v92
  %v115 = vpack.c.bf16 %v95, %v94
  %v116 = vpack.c.bf16 %v97, %v96
  %v117 = vpack.c.bf16 %v111, %v111
  %v118 = vld [vmem:[#allocation2 + $0xb] sm:$0xff]
  %v119 = vld [vmem:[#allocation2 + $0x13] sm:$0xff]
  %v120 = vld [vmem:[#allocation2 + $0x1b] sm:$0xff]
  %v121 = vld [vmem:[#allocation2 + $0x23] sm:$0xff]
  %v122 = vld [vmem:[#allocation2 + $0x2b] sm:$0xff]
  %v123 = vld [vmem:[#allocation2 + $0x33] sm:$0xff]
  %v124 = vld [vmem:[#allocation2 + $0x3b] sm:$0xff]
  %v125 = vld [vmem:[#allocation2 + $0x43] sm:$0xff]
  %v126 = vld [vmem:[#allocation2 + $0x4b] sm:$0xff]
  %v127 = vld [vmem:[#allocation2 + $0x53] sm:$0xff]
  %v128 = vld [vmem:[#allocation2 + $0x5b] sm:$0xff]
  %v129 = vpack.c.bf16 %v119, %v118
  %v130 = vpack.c.bf16 %v121, %v120
  %v131 = vpack.c.bf16 %v123, %v122
  %v132 = vpack.c.bf16 %v125, %v124
  %v133 = vpack.c.bf16 %v127, %v126
  %v134 = vpack.c.bf16 %v128, %v128
  %v135 = vld [vmem:[#allocation2 + $0x62] sm:$0xff]
  %v136 = vpack.c.bf16 %v111, %v97
  %v137 = vpack.c.bf16 %v135, %v135
  %v138 = vld [vmem:[#allocation2 + $0x63] sm:$0xff]
  %v139 = vpack.c.bf16 %v120, %v119
  %v140 = vpack.c.bf16 %v122, %v121
  %v141 = vpack.c.bf16 %v124, %v123
  %v142 = vpack.c.bf16 %v126, %v125
  %v143 = vpack.c.bf16 %v128, %v127
  %v144 = vpack.c.bf16 %v138, %v138
  %v145 = vld [vmem:[#allocation2 + $0x14] sm:$0xff]
  %v146 = vld [vmem:[#allocation2 + $0x1c] sm:$0xff]
  %v147 = vld [vmem:[#allocation2 + $0x24] sm:$0xff]
  %v148 = vld [vmem:[#allocation2 + $0x2c] sm:$0xff]
  %v149 = vld [vmem:[#allocation2 + $0x34] sm:$0xff]
  %v150 = vld [vmem:[#allocation2 + $0x3c] sm:$0xff]
  %v151 = vld [vmem:[#allocation2 + $0x44] sm:$0xff]
  %v152 = vld [vmem:[#allocation2 + $0x4c] sm:$0xff]
  %v153 = vld [vmem:[#allocation2 + $0x54] sm:$0xff]
  %v154 = vld [vmem:[#allocation2 + $0x5c] sm:$0xff]
  %v155 = vld [vmem:[#allocation2 + $0x64] sm:$0xff]
  %v156 = vpack.c.bf16 %v146, %v145
  %v157 = vpack.c.bf16 %v148, %v147
  %v158 = vpack.c.bf16 %v150, %v149
  %v159 = vpack.c.bf16 %v152, %v151
  %v160 = vpack.c.bf16 %v154, %v153
  %v161 = vpack.c.bf16 %v155, %v155
  %v162 = vld [vmem:[%s1] sm:$0xf]
  %v163 = vld [vmem:[%s1 + $0x4] sm:$0xf]
  %v164 = vld [vmem:[%s1 + $0x8] sm:$0xf]
  %v165 = vld [vmem:[%s1 + $0xc] sm:$0xf]
  %v166 = vld [vmem:[%s1 + $0x10] sm:$0xf]
  %v167 = vld [vmem:[%s1 + $0x14] sm:$0xf]
  %v168 = vld [vmem:[%s1 + $0x18] sm:$0xf]
  %v169 = vld [vmem:[%s1 + $0x1c] sm:$0xf]
  %v170 = vld [vmem:[%s1 + $0x20] sm:$0xf]
  %v171 = vld [vmem:[%s1 + $0x24] sm:$0xf]
  %v172 = vld [vmem:[%s1 + $0x28] sm:$0xf]
  %v173 = vld [vmem:[%s1 + $0x2c] sm:$0xf]
  %v174 = vld [vmem:[%s1 + $0x30] sm:$0xf]
  %v175 = vld [vmem:[%s1 + $0x34] sm:$0xf]
  %v176 = vld [vmem:[%s1 + $0x38] sm:$0xf]
  %v177 = vld [vmem:[%s1 + $0x3c] sm:$0xf]
  %v178 = vld [vmem:[%s1 + $0x40] sm:$0xf]
  %v179 = vld [vmem:[%s1 + $0x44] sm:$0xf]
  %v180 = vld [vmem:[%s1 + $0x48] sm:$0xf]
  %v181 = vld [vmem:[%s1 + $0x4c] sm:$0xf]
  %v182 = vld [vmem:[%s1 + $0x50] sm:$0xf]
  %v183 = vld [vmem:[%s1 + $0x54] sm:$0xf]
  %v184 = vld [vmem:[%s1 + $0x58] sm:$0xf]
  %v185 = vld [vmem:[%s1 + $0x5c] sm:$0xf]
  %v186 = vld [vmem:[%s1 + $0x60] sm:$0xf]
  %v187 = vld [vmem:[%s1 + $0x64] sm:$0xf]
  %v188 = vld [vmem:[%s1 + $0x68] sm:$0xf]
  %v189 = vld [vmem:[%s1 + $0x6c] sm:$0xf]
  %v190 = vld [vmem:[%s1 + $0x70] sm:$0xf]
  %v191 = vld [vmem:[%s1 + $0x74] sm:$0xf]
  %v192 = vld [vmem:[%s1 + $0x78] sm:$0xf]
  %v193 = vld [vmem:[%s1 + $0x7c] sm:$0xf]
  %v194 = vld [vmem:[%s1 + $0x80] sm:$0xf]
  %v195 = vld [vmem:[%s1 + $0x84] sm:$0xf]
  %v196 = vld [vmem:[%s1 + $0x88] sm:$0xf]
  %v197 = vld [vmem:[%s1 + $0x8c] sm:$0xf]
  %v198 = vld [vmem:[%s1 + $0x90] sm:$0xf]
  %v199 = vld [vmem:[%s1 + $0x94] sm:$0xf]
  %v200 = vld [vmem:[%s1 + $0x98] sm:$0xf]
  %v201 = vld [vmem:[%s1 + $0x9c] sm:$0xf]
  %v202 = vld [vmem:[%s1 + $0xa0] sm:$0xf]
  %v203 = vld [vmem:[%s1 + $0xa4] sm:$0xf]
  %v204 = vld [vmem:[%s1 + $0xa8] sm:$0xf]
  %v205 = vld [vmem:[%s1 + $0xac] sm:$0xf]
  %v206 = vld [vmem:[%s1 + $0xb0] sm:$0xf]
  %v207 = vld [vmem:[%s1 + $0xb4] sm:$0xf]
  %v208 = vld [vmem:[%s1 + $0xb8] sm:$0xf]
  %v209 = vld [vmem:[%s1 + $0xbc] sm:$0xf]
  %v210 = vld [vmem:[%s1 + $0xc0] sm:$0xf]
  %v211 = vld [vmem:[%s1 + $0xc4] sm:$0xf]
  %v212 = vld [vmem:[%s1 + $0xc8] sm:$0xf]
  %v213 = vld [vmem:[%s1 + $0xcc] sm:$0xf]
  %v214 = vld [vmem:[%s1 + $0xd0] sm:$0xf]
  %v215 = vld [vmem:[%s1 + $0xd4] sm:$0xf]
  %v216 = vld [vmem:[%s1 + $0xd8] sm:$0xf]
  %v217 = vld [vmem:[%s1 + $0xdc] sm:$0xf]
  %v218 = vld [vmem:[%s1 + $0xe0] sm:$0xf]
  %v219 = vld [vmem:[%s1 + $0xe4] sm:$0xf]
  %v220 = vld [vmem:[%s1 + $0xe8] sm:$0xf]
  %v221 = vld [vmem:[%s1 + $0xec] sm:$0xf]
  %v222 = vld [vmem:[%s1 + $0xf0] sm:$0xf]
  %v223 = vld [vmem:[%s1 + $0xf4] sm:$0xf]
  %v224 = vld [vmem:[%s1 + $0xf8] sm:$0xf]
  %v225 = vld [vmem:[%s1 + $0xfc] sm:$0xf]
  %v226 = vld [vmem:[%s1 + $0x100] sm:$0xf]
  %v227 = vld [vmem:[%s1 + $0x104] sm:$0xf]
  %v228 = vld [vmem:[%s1 + $0x108] sm:$0xf]
  %v229 = vld [vmem:[%s1 + $0x10c] sm:$0xf]
  %v230 = vld [vmem:[%s1 + $0x110] sm:$0xf]
  %v231 = vld [vmem:[%s1 + $0x114] sm:$0xf]
  %v232 = vld [vmem:[%s1 + $0x118] sm:$0xf]
  %v233 = vld [vmem:[%s1 + $0x11c] sm:$0xf]
  %v234 = vld [vmem:[%s1 + $0x120] sm:$0xf]
  %v235 = vld [vmem:[%s1 + $0x124] sm:$0xf]
  %v236 = vld [vmem:[%s1 + $0x128] sm:$0xf]
  %v237 = vld [vmem:[%s1 + $0x12c] sm:$0xf]
  %v238 = vld [vmem:[%s1 + $0x130] sm:$0xf]
  %v239 = vld [vmem:[%s1 + $0x134] sm:$0xf]
  %v240 = vld [vmem:[%s1 + $0x138] sm:$0xf]
  %v241 = vld [vmem:[%s1 + $0x13c] sm:$0xf]
  %v242 = vld [vmem:[%s1 + $0x140] sm:$0xf]
  %v243 = vld [vmem:[%s1 + $0x144] sm:$0xf]
  %v244 = vld [vmem:[%s1 + $0x148] sm:$0xf]
  %v245 = vld [vmem:[%s1 + $0x14c] sm:$0xf]
  %v246 = vld [vmem:[%s1 + $0x150] sm:$0xf]
  %v247 = vld [vmem:[%s1 + $0x154] sm:$0xf]
  %v248 = vld [vmem:[%s1 + $0x158] sm:$0xf]
  %v249 = vld [vmem:[%s1 + $0x15c] sm:$0xf]
  %v250 = vld [vmem:[%s1 + $0x160] sm:$0xf]
  %v251 = vld [vmem:[%s1 + $0x164] sm:$0xf]
  %v252 = vld [vmem:[%s1 + $0x168] sm:$0xf]
  %v253 = vld [vmem:[%s1 + $0x16c] sm:$0xf]
  %v254 = vld [vmem:[%s1 + $0x170] sm:$0xf]
  %v255 = vld [vmem:[%s1 + $0x174] sm:$0xf]
  %v256 = vld [vmem:[%s1 + $0x178] sm:$0xf]
  %v257 = vld [vmem:[%s1 + $0x17c] sm:$0xf]
  %v258 = vld [vmem:[%s1 + $0x180] sm:$0xf]
  %v259 = vld [vmem:[%s1 + $0x184] sm:$0xf]
  %v260 = vld [vmem:[%s1 + $0x188] sm:$0xf]
  %v261 = vld [vmem:[%s1 + $0x18c] sm:$0xf]
  %v262 = vld [vmem:[%s1 + $0x190] sm:$0xf]
  %v263 = vld [vmem:[%s1 + $0x194] sm:$0xf]
  %v264 = vld [vmem:[%s1 + $0x198] sm:$0xf]
  %v265 = vld [vmem:[%s1 + $0x19c] sm:$0xf]
  %v266 = vld [vmem:[%s1 + $0x1a0] sm:$0xf]
  %v267 = vld [vmem:[%s1 + $0x1a4] sm:$0xf]
  %v268 = vld [vmem:[%s1 + $0x1a8] sm:$0xf]
  %v269 = vld [vmem:[%s1 + $0x1ac] sm:$0xf]
  %v270 = vld [vmem:[%s1 + $0x1b0] sm:$0xf]
  %v271 = vld [vmem:[%s1 + $0x1b4] sm:$0xf]
  %v272 = vld [vmem:[%s1 + $0x1b8] sm:$0xf]
  %v273 = vld [vmem:[%s1 + $0x1bc] sm:$0xf]
  %v274 = vld [vmem:[%s1 + $0x1c0] sm:$0xf]
  %v275 = vld [vmem:[%s1 + $0x1c4] sm:$0xf]
  %v276 = vld [vmem:[%s1 + $0x1c8] sm:$0xf]
  %v277 = vld [vmem:[%s1 + $0x1cc] sm:$0xf]
  %v278 = vld [vmem:[%s1 + $0x1d0] sm:$0xf]
  %v279 = vld [vmem:[%s1 + $0x1d4] sm:$0xf]
  %v280 = vld [vmem:[%s1 + $0x1d8] sm:$0xf]
  %v281 = vld [vmem:[%s1 + $0x1dc] sm:$0xf]
  %v282 = vld [vmem:[%s1 + $0x1e0] sm:$0xf]
  %v283 = vld [vmem:[%s1 + $0x1e4] sm:$0xf]
  %v284 = vld [vmem:[%s1 + $0x1e8] sm:$0xf]
  %v285 = vld [vmem:[%s1 + $0x1ec] sm:$0xf]
  %v286 = vld [vmem:[%s1 + $0x1f0] sm:$0xf]
  %v287 = vld [vmem:[%s1 + $0x1f4] sm:$0xf]
  %v288 = vld [vmem:[%s1 + $0x1f8] sm:$0xf]
  %v289 = vld [vmem:[%s1 + $0x1fc] sm:$0xf]
  %v290 = vld [vmem:[%s1 + $0x200] sm:$0xf]
  %v291 = vld [vmem:[%s1 + $0x204] sm:$0xf]
  %v292 = vld [vmem:[%s1 + $0x208] sm:$0xf]
  %v293 = vld [vmem:[%s1 + $0x20c] sm:$0xf]
  %v294 = vld [vmem:[%s1 + $0x210] sm:$0xf]
  %v295 = vld [vmem:[%s1 + $0x214] sm:$0xf]
  %v296 = vld [vmem:[%s1 + $0x218] sm:$0xf]
  %v297 = vld [vmem:[%s1 + $0x21c] sm:$0xf]
  %v298 = vld [vmem:[%s1 + $0x220] sm:$0xf]
  %v299 = vld [vmem:[%s1 + $0x224] sm:$0xf]
  %v300 = vld [vmem:[%s1 + $0x228] sm:$0xf]
  %v301 = vld [vmem:[%s1 + $0x22c] sm:$0xf]
  %v302 = vld [vmem:[%s1 + $0x230] sm:$0xf]
  %v303 = vld [vmem:[%s1 + $0x234] sm:$0xf]
  %v304 = vld [vmem:[%s1 + $0x238] sm:$0xf]
  %v305 = vld [vmem:[%s1 + $0x23c] sm:$0xf]
  %v450 = vunpack.c.l.b16 %v162
  %v451 = vunpack.c.l.b16 %v163
  %v452 = vunpack.c.l.b16 %v164
  %v453 = vunpack.c.l.b16 %v165
  %v454 = vunpack.c.l.b16 %v166
  %v455 = vunpack.c.l.b16 %v167
  %v456 = vunpack.c.l.b16 %v168
  %v457 = vunpack.c.l.b16 %v169
  %v458 = vunpack.c.l.b16 %v170
  %v459 = vunpack.c.l.b16 %v171
  %v460 = vunpack.c.l.b16 %v172
  %v461 = vunpack.c.l.b16 %v173
  %v462 = vunpack.c.l.b16 %v174
  %v463 = vunpack.c.l.b16 %v175
  %v464 = vunpack.c.l.b16 %v176
  %v465 = vunpack.c.l.b16 %v177
  %v466 = vunpack.c.l.b16 %v178
  %v467 = vunpack.c.l.b16 %v179
  %v468 = vunpack.c.l.b16 %v180
  %v469 = vunpack.c.l.b16 %v181
  %v470 = vunpack.c.l.b16 %v182
  %v471 = vunpack.c.l.b16 %v183
  %v472 = vunpack.c.l.b16 %v184
  %v473 = vunpack.c.l.b16 %v185
  %v474 = vunpack.c.l.b16 %v186
  %v475 = vunpack.c.l.b16 %v187
  %v476 = vunpack.c.l.b16 %v188
  %v477 = vunpack.c.l.b16 %v189
  %v478 = vunpack.c.l.b16 %v190
  %v479 = vunpack.c.l.b16 %v191
  %v480 = vunpack.c.l.b16 %v192
  %v481 = vunpack.c.l.b16 %v193
  %v482 = vunpack.c.l.b16 %v194
  %v483 = vunpack.c.l.b16 %v195
  %v484 = vunpack.c.l.b16 %v196
  %v485 = vunpack.c.l.b16 %v197
  %v486 = vunpack.c.l.b16 %v198
  %v487 = vunpack.c.l.b16 %v199
  %v488 = vunpack.c.l.b16 %v200
  %v489 = vunpack.c.l.b16 %v201
  %v490 = vunpack.c.l.b16 %v202
  %v491 = vunpack.c.l.b16 %v203
  %v492 = vunpack.c.l.b16 %v204
  %v493 = vunpack.c.l.b16 %v205
  %v494 = vunpack.c.l.b16 %v206
  %v495 = vunpack.c.l.b16 %v207
  %v496 = vunpack.c.l.b16 %v208
  %v497 = vunpack.c.l.b16 %v209
  %v498 = vunpack.c.l.b16 %v210
  %v499 = vunpack.c.l.b16 %v211
  %v500 = vunpack.c.l.b16 %v212
  %v501 = vunpack.c.l.b16 %v213
  %v502 = vunpack.c.l.b16 %v214
  %v503 = vunpack.c.l.b16 %v215
  %v504 = vunpack.c.l.b16 %v216
  %v505 = vunpack.c.l.b16 %v217
  %v506 = vunpack.c.l.b16 %v218
  %v507 = vunpack.c.l.b16 %v219
  %v508 = vunpack.c.l.b16 %v220
  %v509 = vunpack.c.l.b16 %v221
  %v510 = vunpack.c.l.b16 %v222
  %v511 = vunpack.c.l.b16 %v223
  %v512 = vunpack.c.l.b16 %v224
  %v513 = vunpack.c.l.b16 %v225
  %v514 = vunpack.c.l.b16 %v226
  %v515 = vunpack.c.l.b16 %v227
  %v516 = vunpack.c.l.b16 %v228
  %v517 = vunpack.c.l.b16 %v229
  %v518 = vunpack.c.l.b16 %v230
  %v519 = vunpack.c.l.b16 %v231
  %v520 = vunpack.c.l.b16 %v232
  %v521 = vunpack.c.l.b16 %v233
  %v522 = vunpack.c.l.b16 %v234
  %v523 = vunpack.c.l.b16 %v235
  %v524 = vunpack.c.l.b16 %v236
  %v525 = vunpack.c.l.b16 %v237
  %v526 = vunpack.c.l.b16 %v238
  %v527 = vunpack.c.l.b16 %v239
  %v528 = vunpack.c.l.b16 %v240
  %v529 = vunpack.c.l.b16 %v241
  %v530 = vunpack.c.l.b16 %v242
  %v531 = vunpack.c.l.b16 %v243
  %v532 = vunpack.c.l.b16 %v244
  %v533 = vunpack.c.l.b16 %v245
  %v534 = vunpack.c.l.b16 %v246
  %v535 = vunpack.c.l.b16 %v247
  %v536 = vunpack.c.l.b16 %v248
  %v537 = vunpack.c.l.b16 %v249
  %v538 = vunpack.c.l.b16 %v250
  %v539 = vunpack.c.l.b16 %v251
  %v540 = vunpack.c.l.b16 %v252
  %v541 = vunpack.c.l.b16 %v253
  %v542 = vunpack.c.l.b16 %v254
  %v543 = vunpack.c.l.b16 %v255
  %v544 = vunpack.c.l.b16 %v256
  %v545 = vunpack.c.l.b16 %v257
  %v546 = vunpack.c.l.b16 %v258
  %v547 = vunpack.c.l.b16 %v259
  %v548 = vunpack.c.l.b16 %v260
  %v549 = vunpack.c.l.b16 %v261
  %v550 = vunpack.c.l.b16 %v262
  %v551 = vunpack.c.l.b16 %v263
  %v552 = vunpack.c.l.b16 %v264
  %v553 = vunpack.c.l.b16 %v265
  %v554 = vunpack.c.l.b16 %v266
  %v555 = vunpack.c.l.b16 %v267
  %v556 = vunpack.c.l.b16 %v268
  %v557 = vunpack.c.l.b16 %v269
  %v558 = vunpack.c.l.b16 %v270
  %v559 = vunpack.c.l.b16 %v271
  %v560 = vunpack.c.l.b16 %v272
  %v561 = vunpack.c.l.b16 %v273
  %v562 = vunpack.c.l.b16 %v274
  %v563 = vunpack.c.l.b16 %v275
  %v564 = vunpack.c.l.b16 %v276
  %v565 = vunpack.c.l.b16 %v277
  %v566 = vunpack.c.l.b16 %v278
  %v567 = vunpack.c.l.b16 %v279
  %v568 = vunpack.c.l.b16 %v280
  %v569 = vunpack.c.l.b16 %v281
  %v570 = vunpack.c.l.b16 %v282
  %v571 = vunpack.c.l.b16 %v283
  %v572 = vunpack.c.l.b16 %v284
  %v573 = vunpack.c.l.b16 %v285
  %v574 = vunpack.c.l.b16 %v286
  %v575 = vunpack.c.l.b16 %v287
  %v576 = vunpack.c.l.b16 %v288
  %v577 = vunpack.c.l.b16 %v289
  %v578 = vunpack.c.l.b16 %v290
  %v579 = vunpack.c.l.b16 %v291
  %v580 = vunpack.c.l.b16 %v292
  %v581 = vunpack.c.l.b16 %v293
  %v582 = vunpack.c.l.b16 %v294
  %v583 = vunpack.c.l.b16 %v295
  %v584 = vunpack.c.l.b16 %v296
  %v585 = vunpack.c.l.b16 %v297
  %v586 = vunpack.c.l.b16 %v298
  %v587 = vunpack.c.l.b16 %v299
  %v588 = vunpack.c.l.b16 %v300
  %v589 = vunpack.c.l.b16 %v301
  %v590 = vunpack.c.l.b16 %v302
  %v591 = vunpack.c.l.b16 %v303
  %v592 = vunpack.c.l.b16 %v304
  %v593 = vunpack.c.l.b16 %v305
  %v594 = vpack.c.b16 %v451, %v450
  %v595 = vpack.c.b16 %v453, %v452
  %v596 = vpack.c.b16 %v455, %v454
  %v597 = vpack.c.b16 %v457, %v456
  %v598 = vpack.c.b16 %v459, %v458
  %v599 = vpack.c.b16 %v461, %v460
  %v600 = vpack.c.b16 %v463, %v462
  %v601 = vpack.c.b16 %v465, %v464
  %v602 = vpack.c.b16 %v467, %v466
  %v603 = vpack.c.b16 %v469, %v468
  %v604 = vpack.c.b16 %v471, %v470
  %v605 = vpack.c.b16 %v473, %v472
  %v606 = vpack.c.b16 %v475, %v474
  %v607 = vpack.c.b16 %v477, %v476
  %v608 = vpack.c.b16 %v479, %v478
  %v609 = vpack.c.b16 %v481, %v480
  %v610 = vpack.c.b16 %v483, %v482
  %v611 = vpack.c.b16 %v485, %v484
  %v612 = vpack.c.b16 %v487, %v486
  %v613 = vpack.c.b16 %v489, %v488
  %v614 = vpack.c.b16 %v491, %v490
  %v615 = vpack.c.b16 %v493, %v492
  %v616 = vpack.c.b16 %v495, %v494
  %v617 = vpack.c.b16 %v497, %v496
  %v618 = vpack.c.b16 %v499, %v498
  %v619 = vpack.c.b16 %v501, %v500
  %v620 = vpack.c.b16 %v503, %v502
  %v621 = vpack.c.b16 %v505, %v504
  %v622 = vpack.c.b16 %v507, %v506
  %v623 = vpack.c.b16 %v509, %v508
  %v624 = vpack.c.b16 %v511, %v510
  %v625 = vpack.c.b16 %v513, %v512
  %v626 = vpack.c.b16 %v515, %v514
  %v627 = vpack.c.b16 %v517, %v516
  %v628 = vpack.c.b16 %v519, %v518
  %v629 = vpack.c.b16 %v521, %v520
  %v630 = vpack.c.b16 %v523, %v522
  %v631 = vpack.c.b16 %v525, %v524
  %v632 = vpack.c.b16 %v527, %v526
  %v633 = vpack.c.b16 %v529, %v528
  %v634 = vpack.c.b16 %v531, %v530
  %v635 = vpack.c.b16 %v533, %v532
  %v636 = vpack.c.b16 %v535, %v534
  %v637 = vpack.c.b16 %v537, %v536
  %v638 = vpack.c.b16 %v539, %v538
  %v639 = vpack.c.b16 %v541, %v540
  %v640 = vpack.c.b16 %v543, %v542
  %v641 = vpack.c.b16 %v545, %v544
  %v642 = vpack.c.b16 %v547, %v546
  %v643 = vpack.c.b16 %v549, %v548
  %v644 = vpack.c.b16 %v551, %v550
  %v645 = vpack.c.b16 %v553, %v552
  %v646 = vpack.c.b16 %v555, %v554
  %v647 = vpack.c.b16 %v557, %v556
  %v648 = vpack.c.b16 %v559, %v558
  %v649 = vpack.c.b16 %v561, %v560
  %v650 = vpack.c.b16 %v563, %v562
  %v651 = vpack.c.b16 %v565, %v564
  %v652 = vpack.c.b16 %v567, %v566
  %v653 = vpack.c.b16 %v569, %v568
  %v654 = vpack.c.b16 %v571, %v570
  %v655 = vpack.c.b16 %v573, %v572
  %v656 = vpack.c.b16 %v575, %v574
  %v657 = vpack.c.b16 %v577, %v576
  %v658 = vpack.c.b16 %v579, %v578
  %v659 = vpack.c.b16 %v581, %v580
  %v660 = vpack.c.b16 %v583, %v582
  %v661 = vpack.c.b16 %v585, %v584
  %v662 = vpack.c.b16 %v587, %v586
  %v663 = vpack.c.b16 %v589, %v588
  %v664 = vpack.c.b16 %v591, %v590
  %v665 = vpack.c.b16 %v593, %v592
  %738 = vmatprep.subr.bf16.mxu0 0
  %739 = vmatpush1.bf16.msra.mxu0 %v601
  %740 = vmatprep.subr.bf16.mxu0 0
  %741 = vmatpush1.bf16.msra.mxu0 %v600
  %742 = vmatprep.subr.bf16.mxu0 0
  %743 = vmatpush1.bf16.msra.mxu0 %v599
  %744 = vmatprep.subr.bf16.mxu0 0
  %745 = vmatpush1.bf16.msra.mxu0 %v598
  %746 = vmatprep.subr.bf16.mxu0 0
  %747 = vmatpush1.bf16.msra.mxu0 %v597
  %748 = vmatprep.subr.bf16.mxu0 0
  %749 = vmatpush1.bf16.msra.mxu0 %v596
  %750 = vmatprep.subr.bf16.mxu0 0
  %751 = vmatpush1.bf16.msra.mxu0 %v595
  %752 = vmatprep.subr.bf16.mxu0 0
  %753 = vmatpush1.bf16.msra.mxu0 %v594
  %754 = vmatprep.subr.bf16.mxu0 0
  %755 = vmatpush2.bf16.msra.mxu0 %v609
  %756 = vmatprep.subr.bf16.mxu0 0
  %757 = vmatpush2.bf16.msra.mxu0 %v608
  %758 = vmatprep.subr.bf16.mxu0 0
  %759 = vmatpush2.bf16.msra.mxu0 %v607
  %760 = vmatprep.subr.bf16.mxu0 0
  %761 = vmatpush2.bf16.msra.mxu0 %v606
  %762 = vmatprep.subr.bf16.mxu0 0
  %763 = vmatpush2.bf16.msra.mxu0 %v605
  %764 = vmatprep.subr.bf16.mxu0 0
  %765 = vmatpush2.bf16.msra.mxu0 %v604
  %766 = vmatprep.subr.bf16.mxu0 0
  %767 = vmatpush2.bf16.msra.mxu0 %v603
  %768 = vmatprep.subr.bf16.mxu0 0
  %769 = vmatpush2.bf16.msra.mxu0 %v602
  %770 = vmatprep.mubr.bf16.mxu0 %v81
  %771 = vmatmul.mubr.bf16.gmra.mxu0 %v64
  %v772 = vpop.f32.mrf.mxu0
  %v773 = vadd.f32 0.0, %v772
  %v774 = vpop.f32.mrf.mxu0
  %v775 = vpop.f32.mrf.mxu0
  %v776 = vadd.f32 0.0, %v775
  %v777 = vpop.f32.mrf.mxu0
  %778 = vmatprep.mubr.bf16.mxu0 %v82
  %779 = vmatmul.mubr.bf16.gmra.mxu0 %v65
  %v780 = vpop.f32.mrf.mxu0
  %v781 = vadd.f32 0.0, %v780
  %v782 = vpop.f32.mrf.mxu0
  %v783 = vpop.f32.mrf.mxu0
  %v784 = vadd.f32 0.0, %v783
  %v785 = vpop.f32.mrf.mxu0
  %786 = vmatprep.mubr.bf16.mxu0 %v83
  %787 = vmatmul.mubr.bf16.gmra.mxu0 %v66
  %v788 = vpop.f32.mrf.mxu0
  %v789 = vadd.f32 0.0, %v788
  %v790 = vpop.f32.mrf.mxu0
  %v791 = vpop.f32.mrf.mxu0
  %v792 = vadd.f32 0.0, %v791
  %v793 = vpop.f32.mrf.mxu0
  %794 = vmatprep.mubr.bf16.mxu0 %v84
  %795 = vmatmul.mubr.bf16.gmra.mxu0 %v67
  %v796 = vpop.f32.mrf.mxu0
  %v797 = vadd.f32 0.0, %v796
  %v798 = vpop.f32.mrf.mxu0
  %v799 = vpop.f32.mrf.mxu0
  %v800 = vadd.f32 0.0, %v799
  %v801 = vpop.f32.mrf.mxu0
  %802 = vmatprep.mubr.bf16.mxu0 %v85
  %803 = vmatmul.mubr.bf16.gmra.mxu0 %v68
  %v804 = vpop.f32.mrf.mxu0
  %v805 = vadd.f32 0.0, %v804
  %v806 = vpop.f32.mrf.mxu0
  %v807 = vpop.f32.mrf.mxu0
  %v808 = vadd.f32 0.0, %v807
  %v809 = vpop.f32.mrf.mxu0
  %810 = vmatprep.mubr.bf16.mxu0 %v86
  %811 = vmatmul.mubr.bf16.gmra.mxu0 %v69
  %v812 = vpop.f32.mrf.mxu0
  %v813 = vadd.f32 0.0, %v812
  %v814 = vpop.f32.mrf.mxu0
  %v815 = vpop.f32.mrf.mxu0
  %v816 = vpop.f32.mrf.mxu0
  %817 = vdwg.mxu0
  %818 = vmatprep.subr.bf16.mxu0 0
  %819 = vmatpush1.bf16.msra.mxu0 %v617
  %820 = vmatprep.subr.bf16.mxu0 0
  %821 = vmatpush1.bf16.msra.mxu0 %v616
  %822 = vmatprep.subr.bf16.mxu0 0
  %823 = vmatpush1.bf16.msra.mxu0 %v615
  %824 = vmatprep.subr.bf16.mxu0 0
  %825 = vmatpush1.bf16.msra.mxu0 %v614
  %826 = vmatprep.subr.bf16.mxu0 0
  %827 = vmatpush1.bf16.msra.mxu0 %v613
  %828 = vmatprep.subr.bf16.mxu0 0
  %829 = vmatpush1.bf16.msra.mxu0 %v612
  %830 = vmatprep.subr.bf16.mxu0 0
  %831 = vmatpush1.bf16.msra.mxu0 %v611
  %832 = vmatprep.subr.bf16.mxu0 0
  %833 = vmatpush1.bf16.msra.mxu0 %v610
  %834 = vmatprep.subr.bf16.mxu0 0
  %835 = vmatpush2.bf16.msra.mxu0 %v625
  %836 = vmatprep.subr.bf16.mxu0 0
  %837 = vmatpush2.bf16.msra.mxu0 %v624
  %838 = vmatprep.subr.bf16.mxu0 0
  %839 = vmatpush2.bf16.msra.mxu0 %v623
  %840 = vmatprep.subr.bf16.mxu0 0
  %841 = vmatpush2.bf16.msra.mxu0 %v622
  %842 = vmatprep.subr.bf16.mxu0 0
  %843 = vmatpush2.bf16.msra.mxu0 %v621
  %844 = vmatprep.subr.bf16.mxu0 0
  %845 = vmatpush2.bf16.msra.mxu0 %v620
  %846 = vmatprep.subr.bf16.mxu0 0
  %847 = vmatpush2.bf16.msra.mxu0 %v619
  %848 = vmatprep.subr.bf16.mxu0 0
  %849 = vmatpush2.bf16.msra.mxu0 %v618
  %850 = vmatprep.mubr.bf16.mxu0 %v105
  %851 = vmatmul.mubr.bf16.gmra.mxu0 %v98
  %v852 = vpop.f32.mrf.mxu0
  %v853 = vadd.f32 %v773, %v852
  %v854 = vpop.f32.mrf.mxu0
  %v855 = vpop.f32.mrf.mxu0
  %v856 = vadd.f32 %v776, %v855
  %v857 = vpop.f32.mrf.mxu0
  %858 = vmatprep.mubr.bf16.mxu0 %v106
  %859 = vmatmul.mubr.bf16.gmra.mxu0 %v99
  %v860 = vpop.f32.mrf.mxu0
  %v861 = vadd.f32 %v781, %v860
  %v862 = vpop.f32.mrf.mxu0
  %v863 = vpop.f32.mrf.mxu0
  %v864 = vadd.f32 %v784, %v863
  %v865 = vpop.f32.mrf.mxu0
  %866 = vmatprep.mubr.bf16.mxu0 %v107
  %867 = vmatmul.mubr.bf16.gmra.mxu0 %v100
  %v868 = vpop.f32.mrf.mxu0
  %v869 = vadd.f32 %v789, %v868
  %v870 = vpop.f32.mrf.mxu0
  %v871 = vpop.f32.mrf.mxu0
  %v872 = vadd.f32 %v792, %v871
  %v873 = vpop.f32.mrf.mxu0
  %874 = vmatprep.mubr.bf16.mxu0 %v108
  %875 = vmatmul.mubr.bf16.gmra.mxu0 %v101
  %v876 = vpop.f32.mrf.mxu0
  %v877 = vadd.f32 %v797, %v876
  %v878 = vpop.f32.mrf.mxu0
  %v879 = vpop.f32.mrf.mxu0
  %v880 = vadd.f32 %v800, %v879
  %v881 = vpop.f32.mrf.mxu0
  %882 = vmatprep.mubr.bf16.mxu0 %v109
  %883 = vmatmul.mubr.bf16.gmra.mxu0 %v102
  %v884 = vpop.f32.mrf.mxu0
  %v885 = vadd.f32 %v805, %v884
  %v886 = vpop.f32.mrf.mxu0
  %v887 = vpop.f32.mrf.mxu0
  %v888 = vadd.f32 %v808, %v887
  %v889 = vpop.f32.mrf.mxu0
  %890 = vmatprep.mubr.bf16.mxu0 %v110
  %891 = vmatmul.mubr.bf16.gmra.mxu0 %v103
  %v892 = vpop.f32.mrf.mxu0
  %v893 = vadd.f32 %v813, %v892
  %v894 = vpop.f32.mrf.mxu0
  %v895 = vpop.f32.mrf.mxu0
  %v896 = vpop.f32.mrf.mxu0
  %897 = vdwg.mxu0
  %898 = vmatprep.subr.bf16.mxu0 0
  %899 = vmatpush1.bf16.msra.mxu0 %v633
  %900 = vmatprep.subr.bf16.mxu0 0
  %901 = vmatpush1.bf16.msra.mxu0 %v632
  %902 = vmatprep.subr.bf16.mxu0 0
  %903 = vmatpush1.bf16.msra.mxu0 %v631
  %904 = vmatprep.subr.bf16.mxu0 0
  %905 = vmatpush1.bf16.msra.mxu0 %v630
  %906 = vmatprep.subr.bf16.mxu0 0
  %907 = vmatpush1.bf16.msra.mxu0 %v629
  %908 = vmatprep.subr.bf16.mxu0 0
  %909 = vmatpush1.bf16.msra.mxu0 %v628
  %910 = vmatprep.subr.bf16.mxu0 0
  %911 = vmatpush1.bf16.msra.mxu0 %v627
  %912 = vmatprep.subr.bf16.mxu0 0
  %913 = vmatpush1.bf16.msra.mxu0 %v626
  %914 = vmatprep.subr.bf16.mxu0 0
  %915 = vmatpush2.bf16.msra.mxu0 %v641
  %916 = vmatprep.subr.bf16.mxu0 0
  %917 = vmatpush2.bf16.msra.mxu0 %v640
  %918 = vmatprep.subr.bf16.mxu0 0
  %919 = vmatpush2.bf16.msra.mxu0 %v639
  %920 = vmatprep.subr.bf16.mxu0 0
  %921 = vmatpush2.bf16.msra.mxu0 %v638
  %922 = vmatprep.subr.bf16.mxu0 0
  %923 = vmatpush2.bf16.msra.mxu0 %v637
  %924 = vmatprep.subr.bf16.mxu0 0
  %925 = vmatpush2.bf16.msra.mxu0 %v636
  %926 = vmatprep.subr.bf16.mxu0 0
  %927 = vmatpush2.bf16.msra.mxu0 %v635
  %928 = vmatprep.subr.bf16.mxu0 0
  %929 = vmatpush2.bf16.msra.mxu0 %v634
  %930 = vmatprep.mubr.bf16.mxu0 %v129
  %931 = vmatmul.mubr.bf16.gmra.mxu0 %v112
  %v932 = vpop.f32.mrf.mxu0
  %v933 = vadd.f32 %v853, %v932
  %v934 = vpop.f32.mrf.mxu0
  %v935 = vpop.f32.mrf.mxu0
  %v936 = vadd.f32 %v856, %v935
  %v937 = vpop.f32.mrf.mxu0
  %938 = vmatprep.mubr.bf16.mxu0 %v130
  %939 = vmatmul.mubr.bf16.gmra.mxu0 %v113
  %v940 = vpop.f32.mrf.mxu0
  %v941 = vadd.f32 %v861, %v940
  %v942 = vpop.f32.mrf.mxu0
  %v943 = vpop.f32.mrf.mxu0
  %v944 = vadd.f32 %v864, %v943
  %v945 = vpop.f32.mrf.mxu0
  %946 = vmatprep.mubr.bf16.mxu0 %v131
  %947 = vmatmul.mubr.bf16.gmra.mxu0 %v114
  %v948 = vpop.f32.mrf.mxu0
  %v949 = vadd.f32 %v869, %v948
  %v950 = vpop.f32.mrf.mxu0
  %v951 = vpop.f32.mrf.mxu0
  %v952 = vadd.f32 %v872, %v951
  %v953 = vpop.f32.mrf.mxu0
  %954 = vmatprep.mubr.bf16.mxu0 %v132
  %955 = vmatmul.mubr.bf16.gmra.mxu0 %v115
  %v956 = vpop.f32.mrf.mxu0
  %v957 = vadd.f32 %v877, %v956
  %v958 = vpop.f32.mrf.mxu0
  %v959 = vpop.f32.mrf.mxu0
  %v960 = vadd.f32 %v880, %v959
  %v961 = vpop.f32.mrf.mxu0
  %962 = vmatprep.mubr.bf16.mxu0 %v133
  %963 = vmatmul.mubr.bf16.gmra.mxu0 %v116
  %v964 = vpop.f32.mrf.mxu0
  %v965 = vadd.f32 %v885, %v964
  %v966 = vpop.f32.mrf.mxu0
  %v967 = vpop.f32.mrf.mxu0
  %v968 = vadd.f32 %v888, %v967
  %v969 = vpop.f32.mrf.mxu0
  %970 = vmatprep.mubr.bf16.mxu0 %v134
  %971 = vmatmul.mubr.bf16.gmra.mxu0 %v117
  %v972 = vpop.f32.mrf.mxu0
  %v973 = vadd.f32 %v893, %v972
  %v974 = vpop.f32.mrf.mxu0
  %v975 = vpop.f32.mrf.mxu0
  %v976 = vpop.f32.mrf.mxu0
  %977 = vdwg.mxu0
  %978 = vmatprep.subr.bf16.mxu0 0
  %979 = vmatpush1.bf16.msra.mxu0 %v649
  %980 = vmatprep.subr.bf16.mxu0 0
  %981 = vmatpush1.bf16.msra.mxu0 %v648
  %982 = vmatprep.subr.bf16.mxu0 0
  %983 = vmatpush1.bf16.msra.mxu0 %v647
  %984 = vmatprep.subr.bf16.mxu0 0
  %985 = vmatpush1.bf16.msra.mxu0 %v646
  %986 = vmatprep.subr.bf16.mxu0 0
  %987 = vmatpush1.bf16.msra.mxu0 %v645
  %988 = vmatprep.subr.bf16.mxu0 0
  %989 = vmatpush1.bf16.msra.mxu0 %v644
  %990 = vmatprep.subr.bf16.mxu0 0
  %991 = vmatpush1.bf16.msra.mxu0 %v643
  %992 = vmatprep.subr.bf16.mxu0 0
  %993 = vmatpush1.bf16.msra.mxu0 %v642
  %994 = vmatprep.subr.bf16.mxu0 0
  %995 = vmatpush2.bf16.msra.mxu0 %v657
  %996 = vmatprep.subr.bf16.mxu0 0
  %997 = vmatpush2.bf16.msra.mxu0 %v656
  %998 = vmatprep.subr.bf16.mxu0 0
  %999 = vmatpush2.bf16.msra.mxu0 %v655
  %1000 = vmatprep.subr.bf16.mxu0 0
  %1001 = vmatpush2.bf16.msra.mxu0 %v654
  %1002 = vmatprep.subr.bf16.mxu0 0
  %1003 = vmatpush2.bf16.msra.mxu0 %v653
  %1004 = vmatprep.subr.bf16.mxu0 0
  %1005 = vmatpush2.bf16.msra.mxu0 %v652
  %1006 = vmatprep.subr.bf16.mxu0 0
  %1007 = vmatpush2.bf16.msra.mxu0 %v651
  %1008 = vmatprep.subr.bf16.mxu0 0
  %1009 = vmatpush2.bf16.msra.mxu0 %v650
  %1010 = vmatprep.mubr.bf16.mxu0 %v139
  %1011 = vmatmul.mubr.bf16.gmra.mxu0 %v99
  %v1012 = vpop.f32.mrf.mxu0
  %v1013 = vadd.f32 %v933, %v1012
  %v1014 = vpop.f32.mrf.mxu0
  %v1015 = vpop.f32.mrf.mxu0
  %v1016 = vadd.f32 %v936, %v1015
  %v1017 = vpop.f32.mrf.mxu0
  %1018 = vmatprep.mubr.bf16.mxu0 %v140
  %1019 = vmatmul.mubr.bf16.gmra.mxu0 %v100
  %v1020 = vpop.f32.mrf.mxu0
  %v1021 = vadd.f32 %v941, %v1020
  %v1022 = vpop.f32.mrf.mxu0
  %v1023 = vpop.f32.mrf.mxu0
  %v1024 = vadd.f32 %v944, %v1023
  %v1025 = vpop.f32.mrf.mxu0
  %1026 = vmatprep.mubr.bf16.mxu0 %v141
  %1027 = vmatmul.mubr.bf16.gmra.mxu0 %v101
  %v1028 = vpop.f32.mrf.mxu0
  %v1029 = vadd.f32 %v949, %v1028
  %v1030 = vpop.f32.mrf.mxu0
  %v1031 = vpop.f32.mrf.mxu0
  %v1032 = vadd.f32 %v952, %v1031
  %v1033 = vpop.f32.mrf.mxu0
  %1034 = vmatprep.mubr.bf16.mxu0 %v142
  %1035 = vmatmul.mubr.bf16.gmra.mxu0 %v102
  %v1036 = vpop.f32.mrf.mxu0
  %v1037 = vadd.f32 %v957, %v1036
  %v1038 = vpop.f32.mrf.mxu0
  %v1039 = vpop.f32.mrf.mxu0
  %v1040 = vadd.f32 %v960, %v1039
  %v1041 = vpop.f32.mrf.mxu0
  %1042 = vmatprep.mubr.bf16.mxu0 %v143
  %1043 = vmatmul.mubr.bf16.gmra.mxu0 %v136
  %v1044 = vpop.f32.mrf.mxu0
  %v1045 = vadd.f32 %v965, %v1044
  %v1046 = vpop.f32.mrf.mxu0
  %v1047 = vpop.f32.mrf.mxu0
  %v1048 = vadd.f32 %v968, %v1047
  %v1049 = vpop.f32.mrf.mxu0
  %1050 = vmatprep.mubr.bf16.mxu0 %v144
  %1051 = vmatmul.mubr.bf16.gmra.mxu0 %v137
  %v1052 = vpop.f32.mrf.mxu0
  %v1053 = vadd.f32 %v973, %v1052
  %v1054 = vpop.f32.mrf.mxu0
  %v1055 = vpop.f32.mrf.mxu0
  %v1056 = vpop.f32.mrf.mxu0
  %1057 = vdwg.mxu0
  %1058 = vmatprep.subr.bf16.mxu0 0
  %1059 = vmatpush1.bf16.msra.mxu0 %v665
  %1060 = vmatprep.subr.bf16.mxu0 0
  %1061 = vmatpush1.bf16.msra.mxu0 %v664
  %1062 = vmatprep.subr.bf16.mxu0 0
  %1063 = vmatpush1.bf16.msra.mxu0 %v663
  %1064 = vmatprep.subr.bf16.mxu0 0
  %1065 = vmatpush1.bf16.msra.mxu0 %v662
  %1066 = vmatprep.subr.bf16.mxu0 0
  %1067 = vmatpush1.bf16.msra.mxu0 %v661
  %1068 = vmatprep.subr.bf16.mxu0 0
  %1069 = vmatpush1.bf16.msra.mxu0 %v660
  %1070 = vmatprep.subr.bf16.mxu0 0
  %1071 = vmatpush1.bf16.msra.mxu0 %v659
  %1072 = vmatprep.subr.bf16.mxu0 0
  %1073 = vmatpush1.bf16.msra.mxu0 %v658
  %1074 = vmatprep.subr.bf16.mxu0 0
  %1075 = vmatpush2.bf16.msra.mxu0 0
  %1076 = vmatprep.subr.bf16.mxu0 0
  %1077 = vmatpush2.bf16.msra.mxu0 0
  %1078 = vmatprep.subr.bf16.mxu0 0
  %1079 = vmatpush2.bf16.msra.mxu0 0
  %1080 = vmatprep.subr.bf16.mxu0 0
  %1081 = vmatpush2.bf16.msra.mxu0 0
  %1082 = vmatprep.subr.bf16.mxu0 0
  %1083 = vmatpush2.bf16.msra.mxu0 0
  %1084 = vmatprep.subr.bf16.mxu0 0
  %1085 = vmatpush2.bf16.msra.mxu0 0
  %1086 = vmatprep.subr.bf16.mxu0 0
  %1087 = vmatpush2.bf16.msra.mxu0 0
  %1088 = vmatprep.subr.bf16.mxu0 0
  %1089 = vmatpush2.bf16.msra.mxu0 0
  %1090 = vmatprep.mubr.bf16.mxu0 0
  %1091 = vmatmul.mubr.bf16.gmra.mxu0 %v156
  %v1092 = vpop.f32.mrf.mxu0
  %v1093 = vadd.f32 %v1013, %v1092
  %v1094 = vpop.f32.mrf.mxu0
  %v1095 = vpop.f32.mrf.mxu0
  %v1096 = vadd.f32 %v1016, %v1095
  %v1097 = vpop.f32.mrf.mxu0
  %1098 = vmatprep.mubr.bf16.mxu0 0
  %1099 = vmatmul.mubr.bf16.gmra.mxu0 %v157
  %v1100 = vpop.f32.mrf.mxu0
  %v1101 = vadd.f32 %v1021, %v1100
  %v1102 = vpop.f32.mrf.mxu0
  %v1103 = vpop.f32.mrf.mxu0
  %v1104 = vadd.f32 %v1024, %v1103
  %v1105 = vpop.f32.mrf.mxu0
  %1106 = vmatprep.mubr.bf16.mxu0 0
  %1107 = vmatmul.mubr.bf16.gmra.mxu0 %v158
  %v1108 = vpop.f32.mrf.mxu0
  %v1109 = vadd.f32 %v1029, %v1108
  %v1110 = vpop.f32.mrf.mxu0
  %v1111 = vpop.f32.mrf.mxu0
  %v1112 = vadd.f32 %v1032, %v1111
  %v1113 = vpop.f32.mrf.mxu0
  %1114 = vmatprep.mubr.bf16.mxu0 0
  %1115 = vmatmul.mubr.bf16.gmra.mxu0 %v159
  %v1116 = vpop.f32.mrf.mxu0
  %v1117 = vadd.f32 %v1037, %v1116
  %v1118 = vpop.f32.mrf.mxu0
  %v1119 = vpop.f32.mrf.mxu0
  %v1120 = vadd.f32 %v1040, %v1119
  %v1121 = vpop.f32.mrf.mxu0
  %1122 = vmatprep.mubr.bf16.mxu0 0
  %1123 = vmatmul.mubr.bf16.gmra.mxu0 %v160
  %v1124 = vpop.f32.mrf.mxu0
  %v1125 = vadd.f32 %v1045, %v1124
  %v1126 = vpop.f32.mrf.mxu0
  %v1127 = vpop.f32.mrf.mxu0
  %v1128 = vadd.f32 %v1048, %v1127
  %v1129 = vpop.f32.mrf.mxu0
  %1130 = vmatprep.mubr.bf16.mxu0 0
  %1131 = vmatmul.mubr.bf16.gmra.mxu0 %v161
  %v1132 = vpop.f32.mrf.mxu0
  %v1133 = vadd.f32 %v1053, %v1132
  %v1134 = vpop.f32.mrf.mxu0
  %v1135 = vpop.f32.mrf.mxu0
  %v1136 = vpop.f32.mrf.mxu0
  %1137 = vdwg.mxu0
  %1138 = vst [vmem:[%s2] sm:$0xff] %v1093
  %1139 = vst [vmem:[%s2 + $0x8] sm:$0xff] %v1096
  %1140 = vst [vmem:[%s2 + $0x10] sm:$0xff] %v1101
  %1141 = vst [vmem:[%s2 + $0x18] sm:$0xff] %v1104
  %1142 = vst [vmem:[%s2 + $0x20] sm:$0xff] %v1109
  %1143 = vst [vmem:[%s2 + $0x28] sm:$0xff] %v1112
  %1144 = vst [vmem:[%s2 + $0x30] sm:$0xff] %v1117
  %1145 = vst [vmem:[%s2 + $0x38] sm:$0xff] %v1120
  %1146 = vst [vmem:[%s2 + $0x40] sm:$0xff] %v1125
  %1147 = vst [vmem:[%s2 + $0x48] sm:$0xff] %v1128
  %1148 = vst [vmem:[%s2 + $0x50] sm:$0xff] %v1133
  // Predicated region
  $region10: #{conv2d_3x3.1} parent=0 // pred_check
    _
  $region11: #{conv2d_3x3.1} parent=0 // pred_check_branch
    %1150 = sbr.rel (0) target = $region13
  $region12: #{conv2d_3x3.1} parent=0 // pred_region
    _
  $region13: #{conv2d_3x3.1} parent=0 // pred_fallthru
    _
  // Predicated region
  $region14: #{conv2d_3x3.1} parent=0 // pred_check
    _
  $region15: #{conv2d_3x3.1} parent=0 // pred_check_branch
    %1152 = sbr.rel (0) target = $region17
  $region16: #{conv2d_3x3.1} parent=0 // pred_region
    _
  $region17: #{conv2d_3x3.1} parent=0 // pred_fallthru
    _

</llo_original>
